<compile_context>
chip_gen: v7x
topology: tpu7x:2x2x1
jax: 0.10.0
libtpu: 0.0.40
codegen_flags: <defaults>
</compile_context>

<pallas_src>
import math

import jax
import jax.numpy as jnp
from jax.experimental import pallas as pl
from jax.experimental.pallas import tpu as pltpu


def _interp_matrix(src_len, dst_len):
    """Row-interpolation matrix for bilinear upsample with align_corners=True."""
    i = jnp.arange(dst_len, dtype=jnp.float32)
    if dst_len == 1:
        src = jnp.zeros_like(i)
    else:
        src = i * (src_len - 1) / (dst_len - 1)
    i0 = jnp.clip(jnp.floor(src).astype(jnp.int32), 0, src_len - 1)
    i1 = jnp.clip(i0 + 1, 0, src_len - 1)
    frac = src - i0.astype(jnp.float32)
    m = (jax.nn.one_hot(i0, src_len, dtype=jnp.float32) * (1.0 - frac)[:, None]
         + jax.nn.one_hot(i1, src_len, dtype=jnp.float32) * frac[:, None])
    return m  # (dst_len, src_len)


def _shifted_taps(mat):
    """mat: (dst, src) interp matrix -> (3, dst, src) with the conv's zero padding
    and +-1 tap shift folded in: out[d, i, :] = mat[i + d - 1, :] (0 out of range)."""
    dst = mat.shape[0]
    z = jnp.zeros((1, mat.shape[1]), mat.dtype)
    padded = jnp.concatenate([z, mat, z], axis=0)             # (dst+2, src)
    return jnp.stack([padded[d:d + dst] for d in range(3)], axis=0)


def _spatial_tile(s2):
    """Lane-dense spatial tile for the elementwise pass (pl.cdiv grid handles tails)."""
    for t in (4096, 2048, 1024, 512, 256, 128):
        if s2 % t == 0:
            return t
    return min(s2, 1024)    # non-divisible: masked tail block via pl.cdiv grid


def _choose_nb(n, w2):
    """Samples lane-batched per pass-1 grid step.

    Smallest divisor of n reaching >=256 output lanes (full MXU width on
    v6e/v7x); otherwise the largest divisor.  Prefer >=2 grid steps (v7x has
    two TensorCores) when that still leaves >=128 lanes.
    """
    divs = [d for d in range(1, n + 1) if n % d == 0]
    nb = next((d for d in divs if d * w2 >= 256), divs[-1])
    if n // nb < 2:
        smaller = [d for d in divs if d < nb and d * w2 >= 128]
        if smaller:
            nb = smaller[-1]
    return nb


def _upconv_stats_kernel(x_ref, uw_ref, m_ref, b_ref, pool_ref, y_ref, st_ref):
    # x_ref   : (1, Cin*H, NB*W)      compute dtype, lanes = (nb, w)
    # uw_ref  : (NB*W, 3*NB*W2)       block-diag width interp (+dx taps)
    # m_ref   : (Cout*H2, 3*Cin*H)    conv weights x height interp (+dy taps), dx-concat on K
    # b_ref   : (Cout*H2, 1)          conv bias, f32
    # pool_ref: (Cout, Cout*H2)       per-channel pooling matrix (BN stats), f32
    # y_ref   : (1, Cout*H2, NB*W2)   conv output block (compute dtype, lane-dense)
    # st_ref  : (1, Cout, 2)          f32 packed [sum, sum_of_squares] per channel
    nbw2 = y_ref.shape[2]
    x = x_ref[0]                                              # (Cin*H, NB*W)
    # width interpolation for all samples and all 3 horizontal taps: one matmul
    a = jnp.dot(x, uw_ref[...], preferred_element_type=jnp.float32)  # (Cin*H, 3*NB*W2)
    a = a.astype(m_ref.dtype)
    # regroup the 3 dx tap blocks onto the contraction axis -> single K=3*Cin*H matmul
    a_cat = jnp.concatenate(
        [a[:, dx * nbw2:(dx + 1) * nbw2] for dx in range(3)], axis=0)   # (3*Cin*H, NB*W2)
    y = jnp.dot(m_ref[...], a_cat, preferred_element_type=jnp.float32) + b_ref[...]
    y_ref[0] = y.astype(y_ref.dtype)                          # lane-dense store
    # BN statistics fused into the conv epilogue (f32, biased-variance convention)
    rows = jnp.concatenate([jnp.sum(y, axis=1, keepdims=True),
                            jnp.sum(y * y, axis=1, keepdims=True)], axis=1)  # (Cout*H2, 2)
    st_ref[0] = jnp.dot(pool_ref[...], rows, preferred_element_type=jnp.float32)


def upsampling_block_forward(x, conv_w, conv_b, gamma, beta, eps=1e-5,
                             compute_dtype=jnp.bfloat16):
    N, Cin, H, W = x.shape
    Cout = conv_w.shape[0]
    H2, W2 = 2 * H, 2 * W
    S2 = H2 * W2
    f32 = jnp.float32

    NB = _choose_nb(N, W2)
    NBLK = N // NB

    # ---- tiny offline operand prep (interp matrices + conv-weight folding) ----
    uh = _interp_matrix(H, H2)                         # (H2, H)
    uw = _interp_matrix(W, W2)                         # (W2, W)
    uh_sh = _shifted_taps(uh)                          # (3, H2, H)   vertical taps
    uw_sh = _shifted_taps(uw)                          # (3, W2, W)   horizontal taps

    # block-diagonal width operand:
    #   uw_bd[nb*W + w, dx*(NB*W2) + nb'*W2 + q] = (nb == nb') * uw_sh[dx, q, w]
    uw_t = jnp.transpose(uw_sh, (2, 0, 1))             # (W, 3, W2)
    uw_bd = jnp.einsum('mn,wdq->mwdnq', jnp.eye(NB, dtype=f32), uw_t,
                       precision='highest').reshape(NB * W, 3 * NB * W2)

    # fold conv weights + height interp + vertical taps, concat dx on the K axis:
    #   m_cat[co*H2 + p, dx*Cin*H + ci*H + h] = sum_dy conv_w[co,ci,dy,dx] * uh_sh[dy,p,h]
    m = jnp.einsum('oiyx,yph->xopih', conv_w.astype(f32), uh_sh,
                   precision='highest')                # (3, Cout, H2, Cin, H)
    m_cat = jnp.transpose(m, (1, 2, 0, 3, 4)).reshape(Cout * H2, 3 * Cin * H)

    bias_col = jnp.repeat(conv_b.astype(f32), H2)[:, None]         # (Cout*H2, 1)
    pool = jnp.repeat(jnp.eye(Cout, dtype=f32), H2, axis=1)        # (Cout, Cout*H2)

    # lane-batched input layout (layout plumbing on the small input, done by XLA):
    #   x_cat[nblk, ci*H + h, nb*W + w] = x[nblk*NB + nb, ci, h, w]
    x_cat = (x.reshape(NBLK, NB, Cin, H, W)
              .transpose(0, 2, 3, 1, 4)
              .reshape(NBLK, Cin * H, NB * W)
              .astype(compute_dtype))
    uw_bd = uw_bd.astype(compute_dtype)
    m_cat = m_cat.astype(compute_dtype)

    vmem_cap = 32 * 1024 * 1024   # explicit budget; per-step operands are tiny here

    # ---- pass 1: upsample + 3x3 conv + bias (2 MXU matmuls) + fused BN stats ----
    y1, stats = pl.pallas_call(
        _upconv_stats_kernel,
        grid=(NBLK,),
        in_specs=[
            pl.BlockSpec((1, Cin * H, NB * W), lambda n: (n, 0, 0)),
            pl.BlockSpec((NB * W, 3 * NB * W2), lambda n: (0, 0)),
            pl.BlockSpec((Cout * H2, 3 * Cin * H), lambda n: (0, 0)),
            pl.BlockSpec((Cout * H2, 1), lambda n: (0, 0)),
            pl.BlockSpec((Cout, Cout * H2), lambda n: (0, 0)),
        ],
        out_specs=[
            pl.BlockSpec((1, Cout * H2, NB * W2), lambda n: (n, 0, 0)),
            pl.BlockSpec((1, Cout, 2), lambda n: (n, 0, 0)),
        ],
        out_shape=[
            jax.ShapeDtypeStruct((NBLK, Cout * H2, NB * W2), compute_dtype),
            jax.ShapeDtypeStruct((NBLK, Cout, 2), f32),
        ],
        compiler_params=pltpu.CompilerParams(
            dimension_semantics=("parallel",), vmem_limit_bytes=vmem_cap),
    )(x_cat, uw_bd, m_cat, bias_col, pool)

    # un-batch the lane axis back to per-sample order (free reshape when NB == 1,
    # otherwise one small XLA relayout of the compute-dtype intermediate)
    y2 = (y1.reshape(NBLK, Cout, H2, NB, W2)
            .transpose(0, 3, 1, 2, 4)
            .reshape(N, Cout, S2))

    # ---- pass 2: BN stats finish + normalize + ReLU, fully in-kernel ----
    cnt = float(N * H2 * W2)
    ts = _spatial_tile(S2)
    n_t = pl.cdiv(S2, ts)
    # TODO(synk): running_mean/running_var buffer updates (stateful BN bookkeeping)
    # are not reproduced; this is the training-mode forward (batch stats, biased var).

    def _bn_relu_kernel(y_ref, st_ref, g_ref, b_ref, o_ref):
        # st_ref: (NBLK, Cout, 2) resident stats; finish mean/var/scale/shift here
        s = jnp.sum(st_ref[...], axis=0)                     # (Cout, 2)
        mean = s[:, 0:1] * (1.0 / cnt)                       # (Cout, 1)
        var = jnp.maximum(s[:, 1:2] * (1.0 / cnt) - mean * mean, 0.0)
        scale = g_ref[...] * jax.lax.rsqrt(var + eps)        # (Cout, 1)
        shift = b_ref[...] - mean * scale
        o_ref[...] = jnp.maximum(
            y_ref[...].astype(jnp.float32) * scale + shift, 0.0)

    out = pl.pallas_call(
        _bn_relu_kernel,
        grid=(N, n_t),
        in_specs=[
            pl.BlockSpec((1, Cout, ts), lambda n, t: (n, 0, t)),
            pl.BlockSpec((NBLK, Cout, 2), lambda n, t: (0, 0, 0)),
            pl.BlockSpec((Cout, 1), lambda n, t: (0, 0)),
            pl.BlockSpec((Cout, 1), lambda n, t: (0, 0)),
        ],
        out_specs=pl.BlockSpec((1, Cout, ts), lambda n, t: (n, 0, t)),
        out_shape=jax.ShapeDtypeStruct((N, Cout, S2), f32),
        compiler_params=pltpu.CompilerParams(
            dimension_semantics=("parallel", "parallel"), vmem_limit_bytes=vmem_cap),
    )(y2, stats, gamma.astype(f32)[:, None], beta.astype(f32)[:, None])

    return out.reshape(N, Cout, H2, W2)     # already NCHW — no output transpose


def _reference(x, conv_w, conv_b, gamma, beta, eps=1e-5):
    """Pure-JAX reference of the PyTorch forward (training-mode BN)."""
    uh = _interp_matrix(x.shape[2], 2 * x.shape[2])
    uw = _interp_matrix(x.shape[3], 2 * x.shape[3])
    up = jnp.einsum('ph,nchw,qw->ncpq', uh, x, uw, precision='highest')
    out = jax.lax.conv_general_dilated(
        up, conv_w, window_strides=(1, 1), padding=((1, 1), (1, 1)),
        dimension_numbers=('NCHW', 'OIHW', 'NCHW'),
        precision=jax.lax.Precision.HIGHEST)
    out = out + conv_b[None, :, None, None]
    mean = out.mean(axis=(0, 2, 3), keepdims=True)
    var = jnp.square(out - mean).mean(axis=(0, 2, 3), keepdims=True)
    out = ((out - mean) * jax.lax.rsqrt(var + eps) * gamma[None, :, None, None]
           + beta[None, :, None, None])
    return jnp.maximum(out, 0.0)


if __name__ == "__main__":
    key = jax.random.PRNGKey(0)
    N, Cin, Cout, H, W = 2, 4, 8, 16, 16
    kx, kw, kb, kg, kbt = jax.random.split(key, 5)

    x = jax.random.normal(kx, (N, Cin, H, W), jnp.float32)
    bound = 1.0 / math.sqrt(Cin * 3 * 3)              # PyTorch Conv2d default init range
    conv_w = jax.random.uniform(kw, (Cout, Cin, 3, 3), jnp.float32, -bound, bound)
    conv_b = jax.random.uniform(kb, (Cout,), jnp.float32, -bound, bound)
    gamma = 1.0 + 0.1 * jax.random.normal(kg, (Cout,), jnp.float32)
    beta = 0.1 * jax.random.normal(kbt, (Cout,), jnp.float32)

    ref = _reference(x, conv_w, conv_b, gamma, beta)

    # exact-numerics path (f32 operands and f32 intermediate)
    out32 = jax.block_until_ready(
        upsampling_block_forward(x, conv_w, conv_b, gamma, beta,
                                 compute_dtype=jnp.float32))
    assert out32.shape == (N, Cout, 2 * H, 2 * W), out32.shape
    err32 = float(jnp.max(jnp.abs(out32 - ref)))
    assert err32 < 2e-3, f"f32 max abs error {err32}"

    # default bf16 path (bf16 MXU operands + bf16 intermediate, f32 accumulation)
    outbf = jax.block_until_ready(
        upsampling_block_forward(x, conv_w, conv_b, gamma, beta,
                                 compute_dtype=jnp.bfloat16))
    errbf = float(jnp.max(jnp.abs(outbf - ref)))
    assert errbf < 5e-2, f"bf16 max abs error {errbf}"

    print("KERNEL_OK")
</pallas_src>

<mosaic_0001>
module attributes {stable_mosaic.version = 11 : i64} {
  func.func @_upconv_stats_kernel(%arg0: i32, %arg1: memref<1x64x32xf32, #tpu.memory_space<vmem>>, %arg2: memref<32x192xf32, #tpu.memory_space<vmem>>, %arg3: memref<256x192xf32, #tpu.memory_space<vmem>>, %arg4: memref<256x1xf32, #tpu.memory_space<vmem>>, %arg5: memref<8x256xf32, #tpu.memory_space<vmem>>, %arg6: memref<1x256x64xf32, #tpu.memory_space<vmem>>, %arg7: memref<1x8x2xf32, #tpu.memory_space<vmem>>) attributes {dimension_semantics = [#tpu.dimension_semantics<parallel>], iteration_bounds = array<i64: 1>, scalar_prefetch = 0 : i64, scratch_operands = 0 : i64, tpu.core_type = #tpu.core_type<tc>, window_params = [{transform_indices = @transform_0, window_bounds = array<i64: 1, 64, 32>}, {pipeline_mode = #tpu.pipeline_mode<synchronous>, transform_indices = @transform_1, window_bounds = array<i64: 32, 192>}, {pipeline_mode = #tpu.pipeline_mode<synchronous>, transform_indices = @transform_2, window_bounds = array<i64: 256, 192>}, {pipeline_mode = #tpu.pipeline_mode<synchronous>, transform_indices = @transform_3, window_bounds = array<i64: 256, 1>}, {pipeline_mode = #tpu.pipeline_mode<synchronous>, transform_indices = @transform_4, window_bounds = array<i64: 8, 256>}, {transform_indices = @transform_5, window_bounds = array<i64: 1, 256, 64>}, {transform_indices = @transform_6, window_bounds = array<i64: 1, 8, 2>}]} {
    %c0 = arith.constant 0 : index
    %c0_0 = arith.constant 0 : index
    %c0_1 = arith.constant 0 : index
    %0 = vector.load %arg1[%c0, %c0_0, %c0_1] : memref<1x64x32xf32, #tpu.memory_space<vmem>>, vector<1x64x32xf32>
    %1 = vector.shape_cast %0 : vector<1x64x32xf32> to vector<64x32xf32>
    %c0_2 = arith.constant 0 : index
    %c0_3 = arith.constant 0 : index
    %2 = vector.load %arg2[%c0_2, %c0_3] : memref<32x192xf32, #tpu.memory_space<vmem>>, vector<32x192xf32>
    %cst = arith.constant dense<0.000000e+00> : vector<64x192xf32>
    %3 = tpu.matmul %1, %2, %cst {dimension_numbers = #tpu.dot_dimension_numbers<[1], [0], [0], [1], [0, 0, 1, 1], [], []>} : vector<64x32xf32>, vector<32x192xf32>, vector<64x192xf32> -> vector<64x192xf32>
    %4 = vector.extract_strided_slice %3 {offsets = [0, 0], sizes = [64, 64], strides = [1, 1]} : vector<64x192xf32> to vector<64x64xf32>
    %5 = vector.extract_strided_slice %3 {offsets = [0, 64], sizes = [64, 64], strides = [1, 1]} : vector<64x192xf32> to vector<64x64xf32>
    %6 = vector.extract_strided_slice %3 {offsets = [0, 128], sizes = [64, 64], strides = [1, 1]} : vector<64x192xf32> to vector<64x64xf32>
    %7 = tpu.concatenate %4, %5, %6 in 0 : vector<64x64xf32>, vector<64x64xf32>, vector<64x64xf32> -> vector<192x64xf32>
    %c0_4 = arith.constant 0 : index
    %c0_5 = arith.constant 0 : index
    %8 = vector.load %arg3[%c0_4, %c0_5] : memref<256x192xf32, #tpu.memory_space<vmem>>, vector<256x192xf32>
    %cst_6 = arith.constant dense<0.000000e+00> : vector<256x64xf32>
    %9 = tpu.matmul %8, %7, %cst_6 {dimension_numbers = #tpu.dot_dimension_numbers<[1], [0], [0], [1], [0, 0, 1, 1], [], []>} : vector<256x192xf32>, vector<192x64xf32>, vector<256x64xf32> -> vector<256x64xf32>
    %c0_7 = arith.constant 0 : index
    %c0_8 = arith.constant 0 : index
    %10 = vector.load %arg4[%c0_7, %c0_8] : memref<256x1xf32, #tpu.memory_space<vmem>>, vector<256x1xf32>
    %11 = vector.broadcast %10 : vector<256x1xf32> to vector<256x64xf32>
    %12 = arith.addf %9, %11 : vector<256x64xf32>
    %c0_9 = arith.constant 0 : index
    %c0_10 = arith.constant 0 : index
    %c0_11 = arith.constant 0 : index
    %13 = vector.load %arg6[%c0_9, %c0_10, %c0_11] : memref<1x256x64xf32, #tpu.memory_space<vmem>>, vector<1x256x64xf32>
    %14 = vector.shape_cast %13 : vector<1x256x64xf32> to vector<256x64xf32>
    %15 = vector.shape_cast %12 : vector<256x64xf32> to vector<1x256x64xf32>
    tpu.vector_store %arg6[%c0_9, %c0_10, %c0_11], %15 {strides = array<i32>} : memref<1x256x64xf32, #tpu.memory_space<vmem>>, vector<1x256x64xf32>,
    %cst_12 = arith.constant dense<0.000000e+00> : vector<256xf32>
    %16 = vector.multi_reduction <add>, %12, %cst_12 [1] : vector<256x64xf32> to vector<256xf32>
    %17 = vector.shape_cast %16 : vector<256xf32> to vector<256x1xf32>
    %18 = arith.mulf %12, %12 : vector<256x64xf32>
    %cst_13 = arith.constant dense<0.000000e+00> : vector<256xf32>
    %19 = vector.multi_reduction <add>, %18, %cst_13 [1] : vector<256x64xf32> to vector<256xf32>
    %20 = vector.shape_cast %19 : vector<256xf32> to vector<256x1xf32>
    %21 = tpu.concatenate %17, %20 in 1 : vector<256x1xf32>, vector<256x1xf32> -> vector<256x2xf32>
    %c0_14 = arith.constant 0 : index
    %c0_15 = arith.constant 0 : index
    %22 = vector.load %arg5[%c0_14, %c0_15] : memref<8x256xf32, #tpu.memory_space<vmem>>, vector<8x256xf32>
    %cst_16 = arith.constant dense<0.000000e+00> : vector<8x2xf32>
    %23 = tpu.matmul %22, %21, %cst_16 {dimension_numbers = #tpu.dot_dimension_numbers<[1], [0], [0], [1], [0, 0, 1, 1], [], []>} : vector<8x256xf32>, vector<256x2xf32>, vector<8x2xf32> -> vector<8x2xf32>
    %c0_17 = arith.constant 0 : index
    %c0_18 = arith.constant 0 : index
    %c0_19 = arith.constant 0 : index
    %24 = vector.load %arg7[%c0_17, %c0_18, %c0_19] : memref<1x8x2xf32, #tpu.memory_space<vmem>>, vector<1x8x2xf32>
    %25 = vector.shape_cast %24 : vector<1x8x2xf32> to vector<8x2xf32>
    %26 = vector.shape_cast %23 : vector<8x2xf32> to vector<1x8x2xf32>
    tpu.vector_store %arg7[%c0_17, %c0_18, %c0_19], %26 {strides = array<i32>} : memref<1x8x2xf32, #tpu.memory_space<vmem>>, vector<1x8x2xf32>,
    return
  }
  func.func @transform_0(%arg0: i32) -> (i32, i32, i32) {
    %c0_i32 = arith.constant 0 : i32
    %c0_i32_0 = arith.constant 0 : i32
    %c0_i32_1 = arith.constant 0 : i32
    return %arg0, %c0_i32, %c0_i32_0 : i32, i32, i32
  }
  func.func @transform_1(%arg0: i32) -> (i32, i32) {
    %c0_i32 = arith.constant 0 : i32
    %c0_i32_0 = arith.constant 0 : i32
    %c0_i32_1 = arith.constant 0 : i32
    return %c0_i32, %c0_i32_0 : i32, i32
  }
  func.func @transform_2(%arg0: i32) -> (i32, i32) {
    %c0_i32 = arith.constant 0 : i32
    %c0_i32_0 = arith.constant 0 : i32
    %c0_i32_1 = arith.constant 0 : i32
    return %c0_i32, %c0_i32_0 : i32, i32
  }
  func.func @transform_3(%arg0: i32) -> (i32, i32) {
    %c0_i32 = arith.constant 0 : i32
    %c0_i32_0 = arith.constant 0 : i32
    %c0_i32_1 = arith.constant 0 : i32
    return %c0_i32, %c0_i32_0 : i32, i32
  }
  func.func @transform_4(%arg0: i32) -> (i32, i32) {
    %c0_i32 = arith.constant 0 : i32
    %c0_i32_0 = arith.constant 0 : i32
    %c0_i32_1 = arith.constant 0 : i32
    return %c0_i32, %c0_i32_0 : i32, i32
  }
  func.func @transform_5(%arg0: i32) -> (i32, i32, i32) {
    %c0_i32 = arith.constant 0 : i32
    %c0_i32_0 = arith.constant 0 : i32
    %c0_i32_1 = arith.constant 0 : i32
    return %arg0, %c0_i32, %c0_i32_0 : i32, i32, i32
  }
  func.func @transform_6(%arg0: i32) -> (i32, i32, i32) {
    %c0_i32 = arith.constant 0 : i32
    %c0_i32_0 = arith.constant 0 : i32
    %c0_i32_1 = arith.constant 0 : i32
    return %arg0, %c0_i32, %c0_i32_0 : i32, i32, i32
  }
}

</mosaic_0001>

<llo_original>
// kernel: tpu_custom_call.1
$region0: #{tpu_custom_call.1}
  #allocation0 [shape = 'u32[]', space=smem, size = 0x4, offset = 0x4, fixed_abs, tag = 'smem constant byte address 0x4 - core index']
  #allocation1 [shape = 'u32[144,128]{1,0:T(1,128)}', space=vmem, size = 0x12000, scoped, tag = 'internal scratch']
  %s0 = inlined_call_operand.vmem [shape: f32[1,64,32], index: 0, kind: input, shape index: {}]
  %s1 = inlined_call_operand.vmem [shape: f32[32,192], index: 1, kind: input, shape index: {}]
  %s2 = inlined_call_operand.vmem [shape: f32[256,192], index: 2, kind: input, shape index: {}]
  %s3 = inlined_call_operand.vmem [shape: f32[256,1], index: 3, kind: input, shape index: {}]
  %s4 = inlined_call_operand.vmem [shape: f32[8,256], index: 4, kind: input, shape index: {}]
  %s5 = inlined_call_operand.vmem [shape: f32[1,256,64], index: 5, kind: output, shape index: {0}]
  %s6 = inlined_call_operand.vmem [shape: f32[1,8,2], index: 6, kind: output, shape index: {1}]
  %7 = xla_tuple %s5, %s6
  %s8 = sld [smem:[#allocation0]]
  $region38: #{tpu_custom_call.1} parent=0
    _
  %s10 = ssub.s32 1, %s8
  %s11 = scalar_select 0, %s10, %s8
  // Predicated region
  $region2: #{tpu_custom_call.1} parent=0 // pred_check
    _
  $region3: #{tpu_custom_call.1} parent=0 // pred_check_branch
    %13 = sbr.rel (0) target = $region5
  $region4: #{tpu_custom_call.1} parent=0 // pred_region
    _
  $region5: #{tpu_custom_call.1} parent=0 // pred_fallthru
    _
  // Predicated region
  $region6: #{tpu_custom_call.1} parent=0 // pred_check
    _
  $region7: #{tpu_custom_call.1} parent=0 // pred_check_branch
    %15 = sbr.rel (0) target = $region9
  $region8: #{tpu_custom_call.1} parent=0 // pred_region
    _
  $region9: #{tpu_custom_call.1} parent=0 // pred_fallthru
    _
  // Predicated region
  $region10: #{tpu_custom_call.1} parent=0 // pred_check
    _
  $region11: #{tpu_custom_call.1} parent=0 // pred_check_branch
    %17 = sbr.rel (0) target = $region13
  $region12: #{tpu_custom_call.1} parent=0 // pred_region
    _
  $region13: #{tpu_custom_call.1} parent=0 // pred_fallthru
    _
  // Predicated region
  $region14: #{tpu_custom_call.1} parent=0 // pred_check
    _
  $region15: #{tpu_custom_call.1} parent=0 // pred_check_branch
    %19 = sbr.rel (0) target = $region17
  $region16: #{tpu_custom_call.1} parent=0 // pred_region
    _
  $region17: #{tpu_custom_call.1} parent=0 // pred_fallthru
    _
  // Predicated region
  $region18: #{tpu_custom_call.1} parent=0 // pred_check
    _
  $region19: #{tpu_custom_call.1} parent=0 // pred_check_branch
    %21 = sbr.rel (0) target = $region21
  $region20: #{tpu_custom_call.1} parent=0 // pred_region
    _
  $region21: #{tpu_custom_call.1} parent=0 // pred_fallthru
    _
  %v22 = vld [vmem:[%s0] sm:$0xff]
  %v23 = vld [vmem:[%s0 + $0x8] sm:$0xff]
  %v24 = vld [vmem:[%s0 + $0x10] sm:$0xff]
  %v25 = vld [vmem:[%s0 + $0x18] sm:$0xff]
  %v26 = vld [vmem:[%s0 + $0x20] sm:$0xff]
  %v27 = vld [vmem:[%s0 + $0x28] sm:$0xff]
  %v28 = vld [vmem:[%s0 + $0x30] sm:$0xff]
  %v29 = vld [vmem:[%s0 + $0x38] sm:$0xff]
  %v30 = vld [vmem:[%s1] sm:$0xff]
  %v31 = vld [vmem:[%s1 + $0x8] sm:$0xff]
  %v32 = vld [vmem:[%s1 + $0x10] sm:$0xff]
  %v33 = vld [vmem:[%s1 + $0x18] sm:$0xff]
  %v34 = vld [vmem:[%s1 + $0x20] sm:$0xff]
  %v35 = vld [vmem:[%s1 + $0x28] sm:$0xff]
  %v36 = vld [vmem:[%s1 + $0x30] sm:$0xff]
  %v37 = vld [vmem:[%s1 + $0x38] sm:$0xff]
  %vm38 = vcmask 261120
  %v40 = vsel %vm38, %v22, 0
  %v43 = vsel %vm38, %v23, 0
  %v46 = vsel %vm38, %v24, 0
  %v49 = vsel %vm38, %v25, 0
  %v52 = vsel %vm38, %v26, 0
  %v55 = vsel %vm38, %v27, 0
  %v58 = vsel %vm38, %v28, 0
  %v61 = vsel %vm38, %v29, 0
  %63 = vmatprep.subr.mxu0 %v31
  %64 = vmatpush1.msra.mxu0 %v30
  %65 = vmatprep.subr.mxu0 %v33
  %66 = vmatpush1.msra.mxu0 %v32
  %67 = vmatprep.subr.mxu0 %v35
  %68 = vmatpush1.msra.mxu0 %v34
  %69 = vmatprep.subr.mxu0 %v37
  %70 = vmatpush1.msra.mxu0 %v36
  %71 = vmatprep.subr.mxu0 0.0
  %72 = vmatpush1.msra.mxu0 0.0
  %73 = vmatprep.subr.mxu0 0.0
  %74 = vmatpush1.msra.mxu0 0.0
  %75 = vmatprep.subr.mxu0 0.0
  %76 = vmatpush1.msra.mxu0 0.0
  %77 = vmatprep.subr.mxu0 0.0
  %78 = vmatpush1.msra.mxu0 0.0
  %79 = vmatprep.subr.mxu0 0.0
  %80 = vmatpush1.msra.mxu0 0.0
  %81 = vmatprep.subr.mxu0 0.0
  %82 = vmatpush1.msra.mxu0 0.0
  %83 = vmatprep.subr.mxu0 0.0
  %84 = vmatpush1.msra.mxu0 0.0
  %85 = vmatprep.subr.mxu0 0.0
  %86 = vmatpush1.msra.mxu0 0.0
  %87 = vmatprep.subr.mxu0 0.0
  %88 = vmatpush1.msra.mxu0 0.0
  %89 = vmatprep.subr.mxu0 0.0
  %90 = vmatpush1.msra.mxu0 0.0
  %91 = vmatprep.subr.mxu0 0.0
  %92 = vmatpush1.msra.mxu0 0.0
  %93 = vmatprep.subr.mxu0 0.0
  %94 = vmatpush1.msra.mxu0 0.0
  %95 = vmatprep.subr.mxu0 0.0
  %96 = vmatpush1.msra.mxu0 0.0
  %97 = vmatprep.subr.mxu0 0.0
  %98 = vmatpush1.msra.mxu0 0.0
  %99 = vmatprep.subr.mxu0 0.0
  %100 = vmatpush1.msra.mxu0 0.0
  %101 = vmatprep.subr.mxu0 0.0
  %102 = vmatpush1.msra.mxu0 0.0
  %103 = vmatprep.subr.mxu0 0.0
  %104 = vmatpush1.msra.mxu0 0.0
  %105 = vmatprep.subr.mxu0 0.0
  %106 = vmatpush1.msra.mxu0 0.0
  %107 = vmatprep.subr.mxu0 0.0
  %108 = vmatpush1.msra.mxu0 0.0
  %109 = vmatprep.subr.mxu0 0.0
  %110 = vmatpush1.msra.mxu0 0.0
  %111 = vmatprep.subr.mxu0 0.0
  %112 = vmatpush1.msra.mxu0 0.0
  %113 = vmatprep.subr.mxu0 0.0
  %114 = vmatpush1.msra.mxu0 0.0
  %115 = vmatprep.subr.mxu0 0.0
  %116 = vmatpush1.msra.mxu0 0.0
  %117 = vmatprep.subr.mxu0 0.0
  %118 = vmatpush1.msra.mxu0 0.0
  %119 = vmatprep.subr.mxu0 0.0
  %120 = vmatpush1.msra.mxu0 0.0
  %121 = vmatprep.subr.mxu0 0.0
  %122 = vmatpush1.msra.mxu0 0.0
  %123 = vmatprep.subr.mxu0 0.0
  %124 = vmatpush1.msra.mxu0 0.0
  %125 = vmatprep.subr.mxu0 0.0
  %126 = vmatpush1.msra.mxu0 0.0
  %127 = vmatprep.mubr.f32.mxu0 0.0
  %128 = vmatmul.mubr.f32.gmra.mrb[0].mxu0 %v40
  %v129 = vpop.f32.mrb[0].mxu0
  %v130 = vadd.f32 0.0, %v129
  %v131 = vpop.f32.mrb[0].mxu0
  %v132 = vadd.f32 0.0, %v131
  %133 = vmatprep.mubr.f32.mxu0 0.0
  %134 = vmatmul.mubr.f32.gmra.mrb[0].mxu0 %v43
  %v135 = vpop.f32.mrb[0].mxu0
  %v136 = vadd.f32 0.0, %v135
  %v137 = vpop.f32.mrb[0].mxu0
  %v138 = vadd.f32 0.0, %v137
  %139 = vmatprep.mubr.f32.mxu0 0.0
  %140 = vmatmul.mubr.f32.gmra.mrb[0].mxu0 %v46
  %v141 = vpop.f32.mrb[0].mxu0
  %v142 = vadd.f32 0.0, %v141
  %v143 = vpop.f32.mrb[0].mxu0
  %v144 = vadd.f32 0.0, %v143
  %145 = vmatprep.mubr.f32.mxu0 0.0
  %146 = vmatmul.mubr.f32.gmra.mrb[0].mxu0 %v49
  %v147 = vpop.f32.mrb[0].mxu0
  %v148 = vadd.f32 0.0, %v147
  %v149 = vpop.f32.mrb[0].mxu0
  %v150 = vadd.f32 0.0, %v149
  %151 = vmatprep.mubr.f32.mxu0 0.0
  %152 = vmatmul.mubr.f32.gmra.mrb[0].mxu0 %v52
  %v153 = vpop.f32.mrb[0].mxu0
  %v154 = vadd.f32 0.0, %v153
  %v155 = vpop.f32.mrb[0].mxu0
  %v156 = vadd.f32 0.0, %v155
  %157 = vmatprep.mubr.f32.mxu0 0.0
  %158 = vmatmul.mubr.f32.gmra.mrb[0].mxu0 %v55
  %v159 = vpop.f32.mrb[0].mxu0
  %v160 = vadd.f32 0.0, %v159
  %v161 = vpop.f32.mrb[0].mxu0
  %v162 = vadd.f32 0.0, %v161
  %163 = vmatprep.mubr.f32.mxu0 0.0
  %164 = vmatmul.mubr.f32.gmra.mrb[0].mxu0 %v58
  %v165 = vpop.f32.mrb[0].mxu0
  %v166 = vadd.f32 0.0, %v165
  %v167 = vpop.f32.mrb[0].mxu0
  %v168 = vadd.f32 0.0, %v167
  %169 = vmatprep.mubr.f32.mxu0 0.0
  %170 = vmatmul.mubr.f32.gmra.mrb[0].mxu0 %v61
  %v171 = vpop.f32.mrb[0].mxu0
  %v172 = vadd.f32 0.0, %v171
  %v173 = vpop.f32.mrb[0].mxu0
  %v174 = vadd.f32 0.0, %v173
  %175 = vdwg.mxu0
  %184 = vrot.lane.b32.xlu0 %v130, 64
  %v185 = vpop.permute.xlu0 %184
  %186 = vrot.lane.b32.xlu0 %v136, 64
  %v187 = vpop.permute.xlu0 %186
  %188 = vrot.lane.b32.xlu0 %v142, 64
  %v189 = vpop.permute.xlu0 %188
  %190 = vrot.lane.b32.xlu0 %v148, 64
  %v191 = vpop.permute.xlu0 %190
  %192 = vrot.lane.b32.xlu0 %v154, 64
  %v193 = vpop.permute.xlu0 %192
  %194 = vrot.lane.b32.xlu0 %v160, 64
  %v195 = vpop.permute.xlu0 %194
  %196 = vrot.lane.b32.xlu0 %v166, 64
  %v197 = vpop.permute.xlu0 %196
  %198 = vrot.lane.b32.xlu0 %v172, 64
  %v199 = vpop.permute.xlu0 %198
  %v208 = vld [vmem:[%s2] sm:$0xff]
  %v209 = vld [vmem:[%s2 + $0x8] sm:$0xff]
  %v210 = vld [vmem:[%s2 + $0x10] sm:$0xff]
  %v211 = vld [vmem:[%s2 + $0x18] sm:$0xff]
  %v212 = vld [vmem:[%s2 + $0x20] sm:$0xff]
  %v213 = vld [vmem:[%s2 + $0x28] sm:$0xff]
  %v214 = vld [vmem:[%s2 + $0x30] sm:$0xff]
  %v215 = vld [vmem:[%s2 + $0x38] sm:$0xff]
  %v216 = vld [vmem:[%s2 + $0x40] sm:$0xff]
  %v217 = vld [vmem:[%s2 + $0x48] sm:$0xff]
  %v218 = vld [vmem:[%s2 + $0x50] sm:$0xff]
  %v219 = vld [vmem:[%s2 + $0x58] sm:$0xff]
  %v220 = vld [vmem:[%s2 + $0x60] sm:$0xff]
  %v221 = vld [vmem:[%s2 + $0x68] sm:$0xff]
  %v222 = vld [vmem:[%s2 + $0x70] sm:$0xff]
  %v223 = vld [vmem:[%s2 + $0x78] sm:$0xff]
  %v224 = vld [vmem:[%s2 + $0x80] sm:$0xff]
  %v225 = vld [vmem:[%s2 + $0x88] sm:$0xff]
  %v226 = vld [vmem:[%s2 + $0x90] sm:$0xff]
  %v227 = vld [vmem:[%s2 + $0x98] sm:$0xff]
  %v228 = vld [vmem:[%s2 + $0xa0] sm:$0xff]
  %v229 = vld [vmem:[%s2 + $0xa8] sm:$0xff]
  %v230 = vld [vmem:[%s2 + $0xb0] sm:$0xff]
  %v231 = vld [vmem:[%s2 + $0xb8] sm:$0xff]
  %v232 = vld [vmem:[%s2 + $0xc0] sm:$0xff]
  %v233 = vld [vmem:[%s2 + $0xc8] sm:$0xff]
  %v234 = vld [vmem:[%s2 + $0xd0] sm:$0xff]
  %v235 = vld [vmem:[%s2 + $0xd8] sm:$0xff]
  %v236 = vld [vmem:[%s2 + $0xe0] sm:$0xff]
  %v237 = vld [vmem:[%s2 + $0xe8] sm:$0xff]
  %v238 = vld [vmem:[%s2 + $0xf0] sm:$0xff]
  %v239 = vld [vmem:[%s2 + $0xf8] sm:$0xff]
  %v240 = vld [vmem:[%s2 + $0x100] sm:$0xff]
  %v241 = vld [vmem:[%s2 + $0x108] sm:$0xff]
  %v242 = vld [vmem:[%s2 + $0x110] sm:$0xff]
  %v243 = vld [vmem:[%s2 + $0x118] sm:$0xff]
  %v244 = vld [vmem:[%s2 + $0x120] sm:$0xff]
  %v245 = vld [vmem:[%s2 + $0x128] sm:$0xff]
  %v246 = vld [vmem:[%s2 + $0x130] sm:$0xff]
  %v247 = vld [vmem:[%s2 + $0x138] sm:$0xff]
  %v248 = vld [vmem:[%s2 + $0x140] sm:$0xff]
  %v249 = vld [vmem:[%s2 + $0x148] sm:$0xff]
  %v250 = vld [vmem:[%s2 + $0x150] sm:$0xff]
  %v251 = vld [vmem:[%s2 + $0x158] sm:$0xff]
  %v252 = vld [vmem:[%s2 + $0x160] sm:$0xff]
  %v253 = vld [vmem:[%s2 + $0x168] sm:$0xff]
  %v254 = vld [vmem:[%s2 + $0x170] sm:$0xff]
  %v255 = vld [vmem:[%s2 + $0x178] sm:$0xff]
  %v256 = vld [vmem:[%s2 + $0x180] sm:$0xff]
  %v257 = vld [vmem:[%s2 + $0x188] sm:$0xff]
  %v258 = vld [vmem:[%s2 + $0x190] sm:$0xff]
  %v259 = vld [vmem:[%s2 + $0x198] sm:$0xff]
  %v260 = vld [vmem:[%s2 + $0x1a0] sm:$0xff]
  %v261 = vld [vmem:[%s2 + $0x1a8] sm:$0xff]
  %v262 = vld [vmem:[%s2 + $0x1b0] sm:$0xff]
  %v263 = vld [vmem:[%s2 + $0x1b8] sm:$0xff]
  %v264 = vld [vmem:[%s2 + $0x1c0] sm:$0xff]
  %v265 = vld [vmem:[%s2 + $0x1c8] sm:$0xff]
  %v266 = vld [vmem:[%s2 + $0x1d0] sm:$0xff]
  %v267 = vld [vmem:[%s2 + $0x1d8] sm:$0xff]
  %v268 = vld [vmem:[%s2 + $0x1e0] sm:$0xff]
  %v269 = vld [vmem:[%s2 + $0x1e8] sm:$0xff]
  %v270 = vld [vmem:[%s2 + $0x1f0] sm:$0xff]
  %v271 = vld [vmem:[%s2 + $0x1f8] sm:$0xff]
  %v272 = vld [vmem:[%s3] sm:$0xff]
  %v273 = vld [vmem:[%s3 + $0x8] sm:$0xff]
  %v274 = vld [vmem:[%s3 + $0x10] sm:$0xff]
  %v275 = vld [vmem:[%s3 + $0x18] sm:$0xff]
  %v276 = vld [vmem:[%s3 + $0x20] sm:$0xff]
  %v277 = vld [vmem:[%s3 + $0x28] sm:$0xff]
  %v278 = vld [vmem:[%s3 + $0x30] sm:$0xff]
  %v279 = vld [vmem:[%s3 + $0x38] sm:$0xff]
  %v280 = vld [vmem:[%s3 + $0x40] sm:$0xff]
  %v281 = vld [vmem:[%s3 + $0x48] sm:$0xff]
  %v282 = vld [vmem:[%s3 + $0x50] sm:$0xff]
  %v283 = vld [vmem:[%s3 + $0x58] sm:$0xff]
  %v284 = vld [vmem:[%s3 + $0x60] sm:$0xff]
  %v285 = vld [vmem:[%s3 + $0x68] sm:$0xff]
  %v286 = vld [vmem:[%s3 + $0x70] sm:$0xff]
  %v287 = vld [vmem:[%s3 + $0x78] sm:$0xff]
  %v288 = vld [vmem:[%s3 + $0x80] sm:$0xff]
  %v289 = vld [vmem:[%s3 + $0x88] sm:$0xff]
  %v290 = vld [vmem:[%s3 + $0x90] sm:$0xff]
  %v291 = vld [vmem:[%s3 + $0x98] sm:$0xff]
  %v292 = vld [vmem:[%s3 + $0xa0] sm:$0xff]
  %v293 = vld [vmem:[%s3 + $0xa8] sm:$0xff]
  %v294 = vld [vmem:[%s3 + $0xb0] sm:$0xff]
  %v295 = vld [vmem:[%s3 + $0xb8] sm:$0xff]
  %v296 = vld [vmem:[%s3 + $0xc0] sm:$0xff]
  %v297 = vld [vmem:[%s3 + $0xc8] sm:$0xff]
  %v298 = vld [vmem:[%s3 + $0xd0] sm:$0xff]
  %v299 = vld [vmem:[%s3 + $0xd8] sm:$0xff]
  %v300 = vld [vmem:[%s3 + $0xe0] sm:$0xff]
  %v301 = vld [vmem:[%s3 + $0xe8] sm:$0xff]
  %v302 = vld [vmem:[%s3 + $0xf0] sm:$0xff]
  %v303 = vld [vmem:[%s3 + $0xf8] sm:$0xff]
  %305 = vset.pattern.permute.xlu0 0
  %306 = vperm.xlu0 %305, %v272
  %v307 = vpop.permute.xlu0 %306
  %310 = vset.pattern.permute.xlu0 0
  %311 = vperm.xlu0 %310, %v273
  %v312 = vpop.permute.xlu0 %311
  %315 = vset.pattern.permute.xlu0 0
  %316 = vperm.xlu0 %315, %v274
  %v317 = vpop.permute.xlu0 %316
  %320 = vset.pattern.permute.xlu0 0
  %321 = vperm.xlu0 %320, %v275
  %v322 = vpop.permute.xlu0 %321
  %325 = vset.pattern.permute.xlu0 0
  %326 = vperm.xlu0 %325, %v276
  %v327 = vpop.permute.xlu0 %326
  %330 = vset.pattern.permute.xlu0 0
  %331 = vperm.xlu0 %330, %v277
  %v332 = vpop.permute.xlu0 %331
  %335 = vset.pattern.permute.xlu0 0
  %336 = vperm.xlu0 %335, %v278
  %v337 = vpop.permute.xlu0 %336
  %340 = vset.pattern.permute.xlu0 0
  %341 = vperm.xlu0 %340, %v279
  %v342 = vpop.permute.xlu0 %341
  %345 = vset.pattern.permute.xlu0 0
  %346 = vperm.xlu0 %345, %v280
  %v347 = vpop.permute.xlu0 %346
  %350 = vset.pattern.permute.xlu0 0
  %351 = vperm.xlu0 %350, %v281
  %v352 = vpop.permute.xlu0 %351
  %355 = vset.pattern.permute.xlu0 0
  %356 = vperm.xlu0 %355, %v282
  %v357 = vpop.permute.xlu0 %356
  %360 = vset.pattern.permute.xlu0 0
  %361 = vperm.xlu0 %360, %v283
  %v362 = vpop.permute.xlu0 %361
  %365 = vset.pattern.permute.xlu0 0
  %366 = vperm.xlu0 %365, %v284
  %v367 = vpop.permute.xlu0 %366
  %370 = vset.pattern.permute.xlu0 0
  %371 = vperm.xlu0 %370, %v285
  %v372 = vpop.permute.xlu0 %371
  %375 = vset.pattern.permute.xlu0 0
  %376 = vperm.xlu0 %375, %v286
  %v377 = vpop.permute.xlu0 %376
  %380 = vset.pattern.permute.xlu0 0
  %381 = vperm.xlu0 %380, %v287
  %v382 = vpop.permute.xlu0 %381
  %385 = vset.pattern.permute.xlu0 0
  %386 = vperm.xlu0 %385, %v288
  %v387 = vpop.permute.xlu0 %386
  %390 = vset.pattern.permute.xlu0 0
  %391 = vperm.xlu0 %390, %v289
  %v392 = vpop.permute.xlu0 %391
  %395 = vset.pattern.permute.xlu0 0
  %396 = vperm.xlu0 %395, %v290
  %v397 = vpop.permute.xlu0 %396
  %400 = vset.pattern.permute.xlu0 0
  %401 = vperm.xlu0 %400, %v291
  %v402 = vpop.permute.xlu0 %401
  %405 = vset.pattern.permute.xlu0 0
  %406 = vperm.xlu0 %405, %v292
  %v407 = vpop.permute.xlu0 %406
  %410 = vset.pattern.permute.xlu0 0
  %411 = vperm.xlu0 %410, %v293
  %v412 = vpop.permute.xlu0 %411
  %415 = vset.pattern.permute.xlu0 0
  %416 = vperm.xlu0 %415, %v294
  %v417 = vpop.permute.xlu0 %416
  %420 = vset.pattern.permute.xlu0 0
  %421 = vperm.xlu0 %420, %v295
  %v422 = vpop.permute.xlu0 %421
  %425 = vset.pattern.permute.xlu0 0
  %426 = vperm.xlu0 %425, %v296
  %v427 = vpop.permute.xlu0 %426
  %430 = vset.pattern.permute.xlu0 0
  %431 = vperm.xlu0 %430, %v297
  %v432 = vpop.permute.xlu0 %431
  %435 = vset.pattern.permute.xlu0 0
  %436 = vperm.xlu0 %435, %v298
  %v437 = vpop.permute.xlu0 %436
  %440 = vset.pattern.permute.xlu0 0
  %441 = vperm.xlu0 %440, %v299
  %v442 = vpop.permute.xlu0 %441
  %445 = vset.pattern.permute.xlu0 0
  %446 = vperm.xlu0 %445, %v300
  %v447 = vpop.permute.xlu0 %446
  %450 = vset.pattern.permute.xlu0 0
  %451 = vperm.xlu0 %450, %v301
  %v452 = vpop.permute.xlu0 %451
  %455 = vset.pattern.permute.xlu0 0
  %456 = vperm.xlu0 %455, %v302
  %v457 = vpop.permute.xlu0 %456
  %460 = vset.pattern.permute.xlu0 0
  %461 = vperm.xlu0 %460, %v303
  %v462 = vpop.permute.xlu0 %461
  %vm464 = vcmask 523264
  %v466 = vsel %vm464, %v209, 0
  %v469 = vsel %vm464, %v211, 0
  %v472 = vsel %vm464, %v213, 0
  %v475 = vsel %vm464, %v215, 0
  %v478 = vsel %vm464, %v217, 0
  %v481 = vsel %vm464, %v219, 0
  %v484 = vsel %vm464, %v221, 0
  %v487 = vsel %vm464, %v223, 0
  %v490 = vsel %vm464, %v225, 0
  %v493 = vsel %vm464, %v227, 0
  %v496 = vsel %vm464, %v229, 0
  %v499 = vsel %vm464, %v231, 0
  %v502 = vsel %vm464, %v233, 0
  %v505 = vsel %vm464, %v235, 0
  %v508 = vsel %vm464, %v237, 0
  %v511 = vsel %vm464, %v239, 0
  %v514 = vsel %vm464, %v241, 0
  %v517 = vsel %vm464, %v243, 0
  %v520 = vsel %vm464, %v245, 0
  %v523 = vsel %vm464, %v247, 0
  %v526 = vsel %vm464, %v249, 0
  %v529 = vsel %vm464, %v251, 0
  %v532 = vsel %vm464, %v253, 0
  %v535 = vsel %vm464, %v255, 0
  %v538 = vsel %vm464, %v257, 0
  %v541 = vsel %vm464, %v259, 0
  %v544 = vsel %vm464, %v261, 0
  %v547 = vsel %vm464, %v263, 0
  %v550 = vsel %vm464, %v265, 0
  %v553 = vsel %vm464, %v267, 0
  %v556 = vsel %vm464, %v269, 0
  %v559 = vsel %vm464, %v271, 0
  %561 = vmatprep.subr.mxu0 0.0
  %562 = vmatpush1.msra.mxu0 %v130
  %563 = vmatprep.subr.mxu0 0.0
  %564 = vmatpush1.msra.mxu0 %v136
  %565 = vmatprep.subr.mxu0 0.0
  %566 = vmatpush1.msra.mxu0 %v142
  %567 = vmatprep.subr.mxu0 0.0
  %568 = vmatpush1.msra.mxu0 %v148
  %569 = vmatprep.subr.mxu0 0.0
  %570 = vmatpush1.msra.mxu0 %v154
  %571 = vmatprep.subr.mxu0 0.0
  %572 = vmatpush1.msra.mxu0 %v160
  %573 = vmatprep.subr.mxu0 0.0
  %574 = vmatpush1.msra.mxu0 %v166
  %575 = vmatprep.subr.mxu0 0.0
  %576 = vmatpush1.msra.mxu0 %v172
  %577 = vmatprep.subr.mxu0 0.0
  %578 = vmatpush1.msra.mxu0 %v185
  %579 = vmatprep.subr.mxu0 0.0
  %580 = vmatpush1.msra.mxu0 %v187
  %581 = vmatprep.subr.mxu0 0.0
  %582 = vmatpush1.msra.mxu0 %v189
  %583 = vmatprep.subr.mxu0 0.0
  %584 = vmatpush1.msra.mxu0 %v191
  %585 = vmatprep.subr.mxu0 0.0
  %586 = vmatpush1.msra.mxu0 %v193
  %587 = vmatprep.subr.mxu0 0.0
  %588 = vmatpush1.msra.mxu0 %v195
  %589 = vmatprep.subr.mxu0 0.0
  %590 = vmatpush1.msra.mxu0 %v197
  %591 = vmatprep.subr.mxu0 0.0
  %592 = vmatpush1.msra.mxu0 %v199
  %593 = vmatprep.subr.mxu0 0.0
  %594 = vmatpush1.msra.mxu0 %v132
  %595 = vmatprep.subr.mxu0 0.0
  %596 = vmatpush1.msra.mxu0 %v138
  %597 = vmatprep.subr.mxu0 0.0
  %598 = vmatpush1.msra.mxu0 %v144
  %599 = vmatprep.subr.mxu0 0.0
  %600 = vmatpush1.msra.mxu0 %v150
  %601 = vmatprep.subr.mxu0 0.0
  %602 = vmatpush1.msra.mxu0 %v156
  %603 = vmatprep.subr.mxu0 0.0
  %604 = vmatpush1.msra.mxu0 %v162
  %605 = vmatprep.subr.mxu0 0.0
  %606 = vmatpush1.msra.mxu0 %v168
  %607 = vmatprep.subr.mxu0 0.0
  %608 = vmatpush1.msra.mxu0 %v174
  %609 = vmatprep.subr.mxu0 0.0
  %610 = vmatpush1.msra.mxu0 0.0
  %611 = vmatprep.subr.mxu0 0.0
  %612 = vmatpush1.msra.mxu0 0.0
  %613 = vmatprep.subr.mxu0 0.0
  %614 = vmatpush1.msra.mxu0 0.0
  %615 = vmatprep.subr.mxu0 0.0
  %616 = vmatpush1.msra.mxu0 0.0
  %617 = vmatprep.subr.mxu0 0.0
  %618 = vmatpush1.msra.mxu0 0.0
  %619 = vmatprep.subr.mxu0 0.0
  %620 = vmatpush1.msra.mxu0 0.0
  %621 = vmatprep.subr.mxu0 0.0
  %622 = vmatpush1.msra.mxu0 0.0
  %623 = vmatprep.subr.mxu0 0.0
  %624 = vmatpush1.msra.mxu0 0.0
  %625 = vmatprep.mubr.f32.mxu0 %v466
  %626 = vmatmul.mubr.f32.gmra.mrb[0].mxu0 %v208
  %v627 = vpop.f32.mrb[0].mxu0
  %v628 = vadd.f32 %v307, %v627
  %v629 = vpop.f32.mrb[0].mxu0
  %630 = vmatprep.mubr.f32.mxu0 %v469
  %631 = vmatmul.mubr.f32.gmra.mrb[0].mxu0 %v210
  %v632 = vpop.f32.mrb[0].mxu0
  %v633 = vadd.f32 %v312, %v632
  %v634 = vpop.f32.mrb[0].mxu0
  %635 = vmatprep.mubr.f32.mxu0 %v472
  %636 = vmatmul.mubr.f32.gmra.mrb[0].mxu0 %v212
  %v637 = vpop.f32.mrb[0].mxu0
  %v638 = vadd.f32 %v317, %v637
  %v639 = vpop.f32.mrb[0].mxu0
  %640 = vmatprep.mubr.f32.mxu0 %v475
  %641 = vmatmul.mubr.f32.gmra.mrb[0].mxu0 %v214
  %v642 = vpop.f32.mrb[0].mxu0
  %v643 = vadd.f32 %v322, %v642
  %v644 = vpop.f32.mrb[0].mxu0
  %645 = vmatprep.mubr.f32.mxu0 %v478
  %646 = vmatmul.mubr.f32.gmra.mrb[0].mxu0 %v216
  %v647 = vpop.f32.mrb[0].mxu0
  %v648 = vadd.f32 %v327, %v647
  %v649 = vpop.f32.mrb[0].mxu0
  %650 = vmatprep.mubr.f32.mxu0 %v481
  %651 = vmatmul.mubr.f32.gmra.mrb[0].mxu0 %v218
  %v652 = vpop.f32.mrb[0].mxu0
  %v653 = vadd.f32 %v332, %v652
  %v654 = vpop.f32.mrb[0].mxu0
  %655 = vmatprep.mubr.f32.mxu0 %v484
  %656 = vmatmul.mubr.f32.gmra.mrb[0].mxu0 %v220
  %v657 = vpop.f32.mrb[0].mxu0
  %v658 = vadd.f32 %v337, %v657
  %v659 = vpop.f32.mrb[0].mxu0
  %660 = vmatprep.mubr.f32.mxu0 %v487
  %661 = vmatmul.mubr.f32.gmra.mrb[0].mxu0 %v222
  %v662 = vpop.f32.mrb[0].mxu0
  %v663 = vadd.f32 %v342, %v662
  %v664 = vpop.f32.mrb[0].mxu0
  %665 = vmatprep.mubr.f32.mxu0 %v490
  %666 = vmatmul.mubr.f32.gmra.mrb[0].mxu0 %v224
  %v667 = vpop.f32.mrb[0].mxu0
  %v668 = vadd.f32 %v347, %v667
  %v669 = vpop.f32.mrb[0].mxu0
  %670 = vmatprep.mubr.f32.mxu0 %v493
  %671 = vmatmul.mubr.f32.gmra.mrb[0].mxu0 %v226
  %v672 = vpop.f32.mrb[0].mxu0
  %v673 = vadd.f32 %v352, %v672
  %v674 = vpop.f32.mrb[0].mxu0
  %675 = vmatprep.mubr.f32.mxu0 %v496
  %676 = vmatmul.mubr.f32.gmra.mrb[0].mxu0 %v228
  %v677 = vpop.f32.mrb[0].mxu0
  %v678 = vadd.f32 %v357, %v677
  %v679 = vpop.f32.mrb[0].mxu0
  %680 = vmatprep.mubr.f32.mxu0 %v499
  %681 = vmatmul.mubr.f32.gmra.mrb[0].mxu0 %v230
  %v682 = vpop.f32.mrb[0].mxu0
  %v683 = vadd.f32 %v362, %v682
  %v684 = vpop.f32.mrb[0].mxu0
  %685 = vmatprep.mubr.f32.mxu0 %v502
  %686 = vmatmul.mubr.f32.gmra.mrb[0].mxu0 %v232
  %v687 = vpop.f32.mrb[0].mxu0
  %v688 = vadd.f32 %v367, %v687
  %v689 = vpop.f32.mrb[0].mxu0
  %690 = vmatprep.mubr.f32.mxu0 %v505
  %691 = vmatmul.mubr.f32.gmra.mrb[0].mxu0 %v234
  %v692 = vpop.f32.mrb[0].mxu0
  %v693 = vadd.f32 %v372, %v692
  %v694 = vpop.f32.mrb[0].mxu0
  %695 = vmatprep.mubr.f32.mxu0 %v508
  %696 = vmatmul.mubr.f32.gmra.mrb[0].mxu0 %v236
  %v697 = vpop.f32.mrb[0].mxu0
  %v698 = vadd.f32 %v377, %v697
  %v699 = vpop.f32.mrb[0].mxu0
  %700 = vmatprep.mubr.f32.mxu0 %v511
  %701 = vmatmul.mubr.f32.gmra.mrb[0].mxu0 %v238
  %v702 = vpop.f32.mrb[0].mxu0
  %v703 = vadd.f32 %v382, %v702
  %v704 = vpop.f32.mrb[0].mxu0
  %705 = vmatprep.mubr.f32.mxu0 %v514
  %706 = vmatmul.mubr.f32.gmra.mrb[0].mxu0 %v240
  %v707 = vpop.f32.mrb[0].mxu0
  %v708 = vadd.f32 %v387, %v707
  %v709 = vpop.f32.mrb[0].mxu0
  %710 = vmatprep.mubr.f32.mxu0 %v517
  %711 = vmatmul.mubr.f32.gmra.mrb[0].mxu0 %v242
  %v712 = vpop.f32.mrb[0].mxu0
  %v713 = vadd.f32 %v392, %v712
  %v714 = vpop.f32.mrb[0].mxu0
  %715 = vmatprep.mubr.f32.mxu0 %v520
  %716 = vmatmul.mubr.f32.gmra.mrb[0].mxu0 %v244
  %v717 = vpop.f32.mrb[0].mxu0
  %v718 = vadd.f32 %v397, %v717
  %v719 = vpop.f32.mrb[0].mxu0
  %720 = vmatprep.mubr.f32.mxu0 %v523
  %721 = vmatmul.mubr.f32.gmra.mrb[0].mxu0 %v246
  %v722 = vpop.f32.mrb[0].mxu0
  %v723 = vadd.f32 %v402, %v722
  %v724 = vpop.f32.mrb[0].mxu0
  %725 = vmatprep.mubr.f32.mxu0 %v526
  %726 = vmatmul.mubr.f32.gmra.mrb[0].mxu0 %v248
  %v727 = vpop.f32.mrb[0].mxu0
  %v728 = vadd.f32 %v407, %v727
  %v729 = vpop.f32.mrb[0].mxu0
  %730 = vmatprep.mubr.f32.mxu0 %v529
  %731 = vmatmul.mubr.f32.gmra.mrb[0].mxu0 %v250
  %v732 = vpop.f32.mrb[0].mxu0
  %v733 = vadd.f32 %v412, %v732
  %v734 = vpop.f32.mrb[0].mxu0
  %735 = vmatprep.mubr.f32.mxu0 %v532
  %736 = vmatmul.mubr.f32.gmra.mrb[0].mxu0 %v252
  %v737 = vpop.f32.mrb[0].mxu0
  %v738 = vadd.f32 %v417, %v737
  %v739 = vpop.f32.mrb[0].mxu0
  %740 = vmatprep.mubr.f32.mxu0 %v535
  %741 = vmatmul.mubr.f32.gmra.mrb[0].mxu0 %v254
  %v742 = vpop.f32.mrb[0].mxu0
  %v743 = vadd.f32 %v422, %v742
  %v744 = vpop.f32.mrb[0].mxu0
  %745 = vmatprep.mubr.f32.mxu0 %v538
  %746 = vmatmul.mubr.f32.gmra.mrb[0].mxu0 %v256
  %v747 = vpop.f32.mrb[0].mxu0
  %v748 = vadd.f32 %v427, %v747
  %v749 = vpop.f32.mrb[0].mxu0
  %750 = vmatprep.mubr.f32.mxu0 %v541
  %751 = vmatmul.mubr.f32.gmra.mrb[0].mxu0 %v258
  %v752 = vpop.f32.mrb[0].mxu0
  %v753 = vadd.f32 %v432, %v752
  %v754 = vpop.f32.mrb[0].mxu0
  %755 = vmatprep.mubr.f32.mxu0 %v544
  %756 = vmatmul.mubr.f32.gmra.mrb[0].mxu0 %v260
  %v757 = vpop.f32.mrb[0].mxu0
  %v758 = vadd.f32 %v437, %v757
  %v759 = vpop.f32.mrb[0].mxu0
  %760 = vmatprep.mubr.f32.mxu0 %v547
  %761 = vmatmul.mubr.f32.gmra.mrb[0].mxu0 %v262
  %v762 = vpop.f32.mrb[0].mxu0
  %v763 = vadd.f32 %v442, %v762
  %v764 = vpop.f32.mrb[0].mxu0
  %765 = vmatprep.mubr.f32.mxu0 %v550
  %766 = vmatmul.mubr.f32.gmra.mrb[0].mxu0 %v264
  %v767 = vpop.f32.mrb[0].mxu0
  %v768 = vadd.f32 %v447, %v767
  %v769 = vpop.f32.mrb[0].mxu0
  %770 = vmatprep.mubr.f32.mxu0 %v553
  %771 = vmatmul.mubr.f32.gmra.mrb[0].mxu0 %v266
  %v772 = vpop.f32.mrb[0].mxu0
  %v773 = vadd.f32 %v452, %v772
  %v774 = vpop.f32.mrb[0].mxu0
  %775 = vmatprep.mubr.f32.mxu0 %v556
  %776 = vmatmul.mubr.f32.gmra.mrb[0].mxu0 %v268
  %v777 = vpop.f32.mrb[0].mxu0
  %v778 = vadd.f32 %v457, %v777
  %v779 = vpop.f32.mrb[0].mxu0
  %780 = vmatprep.mubr.f32.mxu0 %v559
  %781 = vmatmul.mubr.f32.gmra.mrb[0].mxu0 %v270
  %v782 = vpop.f32.mrb[0].mxu0
  %v783 = vadd.f32 %v462, %v782
  %v784 = vpop.f32.mrb[0].mxu0
  %785 = vdwg.mxu0
  %786 = vst.msk [vmem:[%s5] sm:$0xff] %vm464, %v628
  %787 = vst.msk [vmem:[%s5 + $0x8] sm:$0xff] %vm464, %v633
  %788 = vst.msk [vmem:[%s5 + $0x10] sm:$0xff] %vm464, %v638
  %789 = vst.msk [vmem:[%s5 + $0x18] sm:$0xff] %vm464, %v643
  %790 = vst.msk [vmem:[%s5 + $0x20] sm:$0xff] %vm464, %v648
  %791 = vst.msk [vmem:[%s5 + $0x28] sm:$0xff] %vm464, %v653
  %792 = vst.msk [vmem:[%s5 + $0x30] sm:$0xff] %vm464, %v658
  %793 = vst.msk [vmem:[%s5 + $0x38] sm:$0xff] %vm464, %v663
  %794 = vst.msk [vmem:[%s5 + $0x40] sm:$0xff] %vm464, %v668
  %795 = vst.msk [vmem:[%s5 + $0x48] sm:$0xff] %vm464, %v673
  %796 = vst.msk [vmem:[%s5 + $0x50] sm:$0xff] %vm464, %v678
  %797 = vst.msk [vmem:[%s5 + $0x58] sm:$0xff] %vm464, %v683
  %798 = vst.msk [vmem:[%s5 + $0x60] sm:$0xff] %vm464, %v688
  %799 = vst.msk [vmem:[%s5 + $0x68] sm:$0xff] %vm464, %v693
  %800 = vst.msk [vmem:[%s5 + $0x70] sm:$0xff] %vm464, %v698
  %801 = vst.msk [vmem:[%s5 + $0x78] sm:$0xff] %vm464, %v703
  %802 = vst.msk [vmem:[%s5 + $0x80] sm:$0xff] %vm464, %v708
  %803 = vst.msk [vmem:[%s5 + $0x88] sm:$0xff] %vm464, %v713
  %804 = vst.msk [vmem:[%s5 + $0x90] sm:$0xff] %vm464, %v718
  %805 = vst.msk [vmem:[%s5 + $0x98] sm:$0xff] %vm464, %v723
  %806 = vst.msk [vmem:[%s5 + $0xa0] sm:$0xff] %vm464, %v728
  %807 = vst.msk [vmem:[%s5 + $0xa8] sm:$0xff] %vm464, %v733
  %808 = vst.msk [vmem:[%s5 + $0xb0] sm:$0xff] %vm464, %v738
  %809 = vst.msk [vmem:[%s5 + $0xb8] sm:$0xff] %vm464, %v743
  %810 = vst.msk [vmem:[%s5 + $0xc0] sm:$0xff] %vm464, %v748
  %811 = vst.msk [vmem:[%s5 + $0xc8] sm:$0xff] %vm464, %v753
  %812 = vst.msk [vmem:[%s5 + $0xd0] sm:$0xff] %vm464, %v758
  %813 = vst.msk [vmem:[%s5 + $0xd8] sm:$0xff] %vm464, %v763
  %814 = vst.msk [vmem:[%s5 + $0xe0] sm:$0xff] %vm464, %v768
  %815 = vst.msk [vmem:[%s5 + $0xe8] sm:$0xff] %vm464, %v773
  %816 = vst.msk [vmem:[%s5 + $0xf0] sm:$0xff] %vm464, %v778
  %817 = vst.msk [vmem:[%s5 + $0xf8] sm:$0xff] %vm464, %v783
  %v818 = vsel %vm464, %v628, 0.0
  %819 = vadd.xlane.f32.xlu0 %v818
  %v820 = vpop.xlane.xlu0 %819
  %v821 = vsel %vm464, %v633, 0.0
  %822 = vadd.xlane.f32.xlu0 %v821
  %v823 = vpop.xlane.xlu0 %822
  %v824 = vsel %vm464, %v638, 0.0
  %825 = vadd.xlane.f32.xlu0 %v824
  %v826 = vpop.xlane.xlu0 %825
  %v827 = vsel %vm464, %v643, 0.0
  %828 = vadd.xlane.f32.xlu0 %v827
  %v829 = vpop.xlane.xlu0 %828
  %v830 = vsel %vm464, %v648, 0.0
  %831 = vadd.xlane.f32.xlu0 %v830
  %v832 = vpop.xlane.xlu0 %831
  %v833 = vsel %vm464, %v653, 0.0
  %834 = vadd.xlane.f32.xlu0 %v833
  %v835 = vpop.xlane.xlu0 %834
  %v836 = vsel %vm464, %v658, 0.0
  %837 = vadd.xlane.f32.xlu0 %v836
  %v838 = vpop.xlane.xlu0 %837
  %v839 = vsel %vm464, %v663, 0.0
  %840 = vadd.xlane.f32.xlu0 %v839
  %v841 = vpop.xlane.xlu0 %840
  %v842 = vsel %vm464, %v668, 0.0
  %843 = vadd.xlane.f32.xlu0 %v842
  %v844 = vpop.xlane.xlu0 %843
  %v845 = vsel %vm464, %v673, 0.0
  %846 = vadd.xlane.f32.xlu0 %v845
  %v847 = vpop.xlane.xlu0 %846
  %v848 = vsel %vm464, %v678, 0.0
  %849 = vadd.xlane.f32.xlu0 %v848
  %v850 = vpop.xlane.xlu0 %849
  %v851 = vsel %vm464, %v683, 0.0
  %852 = vadd.xlane.f32.xlu0 %v851
  %v853 = vpop.xlane.xlu0 %852
  %v854 = vsel %vm464, %v688, 0.0
  %855 = vadd.xlane.f32.xlu0 %v854
  %v856 = vpop.xlane.xlu0 %855
  %v857 = vsel %vm464, %v693, 0.0
  %858 = vadd.xlane.f32.xlu0 %v857
  %v859 = vpop.xlane.xlu0 %858
  %v860 = vsel %vm464, %v698, 0.0
  %861 = vadd.xlane.f32.xlu0 %v860
  %v862 = vpop.xlane.xlu0 %861
  %v863 = vsel %vm464, %v703, 0.0
  %864 = vadd.xlane.f32.xlu0 %v863
  %v865 = vpop.xlane.xlu0 %864
  %v866 = vsel %vm464, %v708, 0.0
  %867 = vadd.xlane.f32.xlu0 %v866
  %v868 = vpop.xlane.xlu0 %867
  %v869 = vsel %vm464, %v713, 0.0
  %870 = vadd.xlane.f32.xlu0 %v869
  %v871 = vpop.xlane.xlu0 %870
  %v872 = vsel %vm464, %v718, 0.0
  %873 = vadd.xlane.f32.xlu0 %v872
  %v874 = vpop.xlane.xlu0 %873
  %v875 = vsel %vm464, %v723, 0.0
  %876 = vadd.xlane.f32.xlu0 %v875
  %v877 = vpop.xlane.xlu0 %876
  %v878 = vsel %vm464, %v728, 0.0
  %879 = vadd.xlane.f32.xlu0 %v878
  %v880 = vpop.xlane.xlu0 %879
  %v881 = vsel %vm464, %v733, 0.0
  %882 = vadd.xlane.f32.xlu0 %v881
  %v883 = vpop.xlane.xlu0 %882
  %v884 = vsel %vm464, %v738, 0.0
  %885 = vadd.xlane.f32.xlu0 %v884
  %v886 = vpop.xlane.xlu0 %885
  %v887 = vsel %vm464, %v743, 0.0
  %888 = vadd.xlane.f32.xlu0 %v887
  %v889 = vpop.xlane.xlu0 %888
  %v890 = vsel %vm464, %v748, 0.0
  %891 = vadd.xlane.f32.xlu0 %v890
  %v892 = vpop.xlane.xlu0 %891
  %v893 = vsel %vm464, %v753, 0.0
  %894 = vadd.xlane.f32.xlu0 %v893
  %v895 = vpop.xlane.xlu0 %894
  %v896 = vsel %vm464, %v758, 0.0
  %897 = vadd.xlane.f32.xlu0 %v896
  %v898 = vpop.xlane.xlu0 %897
  %v899 = vsel %vm464, %v763, 0.0
  %900 = vadd.xlane.f32.xlu0 %v899
  %v901 = vpop.xlane.xlu0 %900
  %v902 = vsel %vm464, %v768, 0.0
  %903 = vadd.xlane.f32.xlu0 %v902
  %v904 = vpop.xlane.xlu0 %903
  %v905 = vsel %vm464, %v773, 0.0
  %906 = vadd.xlane.f32.xlu0 %v905
  %v907 = vpop.xlane.xlu0 %906
  %v908 = vsel %vm464, %v778, 0.0
  %909 = vadd.xlane.f32.xlu0 %v908
  %v910 = vpop.xlane.xlu0 %909
  %v911 = vsel %vm464, %v783, 0.0
  %912 = vadd.xlane.f32.xlu0 %v911
  %v913 = vpop.xlane.xlu0 %912
  %v914 = vmul.f32 %v628, %v628
  %v915 = vmul.f32 %v633, %v633
  %v916 = vmul.f32 %v638, %v638
  %v917 = vmul.f32 %v643, %v643
  %v918 = vmul.f32 %v648, %v648
  %v919 = vmul.f32 %v653, %v653
  %v920 = vmul.f32 %v658, %v658
  %v921 = vmul.f32 %v663, %v663
  %v922 = vmul.f32 %v668, %v668
  %v923 = vmul.f32 %v673, %v673
  %v924 = vmul.f32 %v678, %v678
  %v925 = vmul.f32 %v683, %v683
  %v926 = vmul.f32 %v688, %v688
  %v927 = vmul.f32 %v693, %v693
  %v928 = vmul.f32 %v698, %v698
  %v929 = vmul.f32 %v703, %v703
  %v930 = vmul.f32 %v708, %v708
  %v931 = vmul.f32 %v713, %v713
  %v932 = vmul.f32 %v718, %v718
  %v933 = vmul.f32 %v723, %v723
  %v934 = vmul.f32 %v728, %v728
  %v935 = vmul.f32 %v733, %v733
  %v936 = vmul.f32 %v738, %v738
  %v937 = vmul.f32 %v743, %v743
  %v938 = vmul.f32 %v748, %v748
  %v939 = vmul.f32 %v753, %v753
  %v940 = vmul.f32 %v758, %v758
  %v941 = vmul.f32 %v763, %v763
  %v942 = vmul.f32 %v768, %v768
  %v943 = vmul.f32 %v773, %v773
  %v944 = vmul.f32 %v778, %v778
  %v945 = vmul.f32 %v783, %v783
  %v946 = vsel %vm464, %v914, 0.0
  %947 = vadd.xlane.f32.xlu0 %v946
  %v948 = vpop.xlane.xlu0 %947
  %v949 = vsel %vm464, %v915, 0.0
  %950 = vadd.xlane.f32.xlu0 %v949
  %v951 = vpop.xlane.xlu0 %950
  %v952 = vsel %vm464, %v916, 0.0
  %953 = vadd.xlane.f32.xlu0 %v952
  %v954 = vpop.xlane.xlu0 %953
  %v955 = vsel %vm464, %v917, 0.0
  %956 = vadd.xlane.f32.xlu0 %v955
  %v957 = vpop.xlane.xlu0 %956
  %v958 = vsel %vm464, %v918, 0.0
  %959 = vadd.xlane.f32.xlu0 %v958
  %v960 = vpop.xlane.xlu0 %959
  %v961 = vsel %vm464, %v919, 0.0
  %962 = vadd.xlane.f32.xlu0 %v961
  %v963 = vpop.xlane.xlu0 %962
  %v964 = vsel %vm464, %v920, 0.0
  %965 = vadd.xlane.f32.xlu0 %v964
  %v966 = vpop.xlane.xlu0 %965
  %v967 = vsel %vm464, %v921, 0.0
  %968 = vadd.xlane.f32.xlu0 %v967
  %v969 = vpop.xlane.xlu0 %968
  %v970 = vsel %vm464, %v922, 0.0
  %971 = vadd.xlane.f32.xlu0 %v970
  %v972 = vpop.xlane.xlu0 %971
  %v973 = vsel %vm464, %v923, 0.0
  %974 = vadd.xlane.f32.xlu0 %v973
  %v975 = vpop.xlane.xlu0 %974
  %v976 = vsel %vm464, %v924, 0.0
  %977 = vadd.xlane.f32.xlu0 %v976
  %v978 = vpop.xlane.xlu0 %977
  %v979 = vsel %vm464, %v925, 0.0
  %980 = vadd.xlane.f32.xlu0 %v979
  %v981 = vpop.xlane.xlu0 %980
  %v982 = vsel %vm464, %v926, 0.0
  %983 = vadd.xlane.f32.xlu0 %v982
  %v984 = vpop.xlane.xlu0 %983
  %v985 = vsel %vm464, %v927, 0.0
  %986 = vadd.xlane.f32.xlu0 %v985
  %v987 = vpop.xlane.xlu0 %986
  %v988 = vsel %vm464, %v928, 0.0
  %989 = vadd.xlane.f32.xlu0 %v988
  %v990 = vpop.xlane.xlu0 %989
  %v991 = vsel %vm464, %v929, 0.0
  %992 = vadd.xlane.f32.xlu0 %v991
  %v993 = vpop.xlane.xlu0 %992
  %v994 = vsel %vm464, %v930, 0.0
  %995 = vadd.xlane.f32.xlu0 %v994
  %v996 = vpop.xlane.xlu0 %995
  %v997 = vsel %vm464, %v931, 0.0
  %998 = vadd.xlane.f32.xlu0 %v997
  %v999 = vpop.xlane.xlu0 %998
  %v1000 = vsel %vm464, %v932, 0.0
  %1001 = vadd.xlane.f32.xlu0 %v1000
  %v1002 = vpop.xlane.xlu0 %1001
  %v1003 = vsel %vm464, %v933, 0.0
  %1004 = vadd.xlane.f32.xlu0 %v1003
  %v1005 = vpop.xlane.xlu0 %1004
  %v1006 = vsel %vm464, %v934, 0.0
  %1007 = vadd.xlane.f32.xlu0 %v1006
  %v1008 = vpop.xlane.xlu0 %1007
  %v1009 = vsel %vm464, %v935, 0.0
  %1010 = vadd.xlane.f32.xlu0 %v1009
  %v1011 = vpop.xlane.xlu0 %1010
  %v1012 = vsel %vm464, %v936, 0.0
  %1013 = vadd.xlane.f32.xlu0 %v1012
  %v1014 = vpop.xlane.xlu0 %1013
  %v1015 = vsel %vm464, %v937, 0.0
  %1016 = vadd.xlane.f32.xlu0 %v1015
  %v1017 = vpop.xlane.xlu0 %1016
  %v1018 = vsel %vm464, %v938, 0.0
  %1019 = vadd.xlane.f32.xlu0 %v1018
  %v1020 = vpop.xlane.xlu0 %1019
  %v1021 = vsel %vm464, %v939, 0.0
  %1022 = vadd.xlane.f32.xlu0 %v1021
  %v1023 = vpop.xlane.xlu0 %1022
  %v1024 = vsel %vm464, %v940, 0.0
  %1025 = vadd.xlane.f32.xlu0 %v1024
  %v1026 = vpop.xlane.xlu0 %1025
  %v1027 = vsel %vm464, %v941, 0.0
  %1028 = vadd.xlane.f32.xlu0 %v1027
  %v1029 = vpop.xlane.xlu0 %1028
  %v1030 = vsel %vm464, %v942, 0.0
  %1031 = vadd.xlane.f32.xlu0 %v1030
  %v1032 = vpop.xlane.xlu0 %1031
  %v1033 = vsel %vm464, %v943, 0.0
  %1034 = vadd.xlane.f32.xlu0 %v1033
  %v1035 = vpop.xlane.xlu0 %1034
  %v1036 = vsel %vm464, %v944, 0.0
  %1037 = vadd.xlane.f32.xlu0 %v1036
  %v1038 = vpop.xlane.xlu0 %1037
  %v1039 = vsel %vm464, %v945, 0.0
  %1040 = vadd.xlane.f32.xlu0 %v1039
  %v1041 = vpop.xlane.xlu0 %1040
  %vm1042 = vcmask 7168
  %v1043 = vsel %vm1042, %v820, %v948
  %v1044 = vsel %vm1042, %v823, %v951
  %v1045 = vsel %vm1042, %v826, %v954
  %v1046 = vsel %vm1042, %v829, %v957
  %v1047 = vsel %vm1042, %v832, %v960
  %v1048 = vsel %vm1042, %v835, %v963
  %v1049 = vsel %vm1042, %v838, %v966
  %v1050 = vsel %vm1042, %v841, %v969
  %v1051 = vsel %vm1042, %v844, %v972
  %v1052 = vsel %vm1042, %v847, %v975
  %v1053 = vsel %vm1042, %v850, %v978
  %v1054 = vsel %vm1042, %v853, %v981
  %v1055 = vsel %vm1042, %v856, %v984
  %v1056 = vsel %vm1042, %v859, %v987
  %v1057 = vsel %vm1042, %v862, %v990
  %v1058 = vsel %vm1042, %v865, %v993
  %v1059 = vsel %vm1042, %v868, %v996
  %v1060 = vsel %vm1042, %v871, %v999
  %v1061 = vsel %vm1042, %v874, %v1002
  %v1062 = vsel %vm1042, %v877, %v1005
  %v1063 = vsel %vm1042, %v880, %v1008
  %v1064 = vsel %vm1042, %v883, %v1011
  %v1065 = vsel %vm1042, %v886, %v1014
  %v1066 = vsel %vm1042, %v889, %v1017
  %v1067 = vsel %vm1042, %v892, %v1020
  %v1068 = vsel %vm1042, %v895, %v1023
  %v1069 = vsel %vm1042, %v898, %v1026
  %v1070 = vsel %vm1042, %v901, %v1029
  %v1071 = vsel %vm1042, %v904, %v1032
  %v1072 = vsel %vm1042, %v907, %v1035
  %v1073 = vsel %vm1042, %v910, %v1038
  %v1074 = vsel %vm1042, %v913, %v1041
  %v1075 = vld [vmem:[%s4] sm:$0xff]
  %v1076 = vld [vmem:[%s4 + $0x8] sm:$0xff]
  %1077 = vmatprep.subr.mxu0 0.0
  %1078 = vmatpush1.msra.mxu0 %v1043
  %1079 = vmatprep.subr.mxu0 0.0
  %1080 = vmatpush1.msra.mxu0 %v1044
  %1081 = vmatprep.subr.mxu0 0.0
  %1082 = vmatpush1.msra.mxu0 %v1045
  %1083 = vmatprep.subr.mxu0 0.0
  %1084 = vmatpush1.msra.mxu0 %v1046
  %1085 = vmatprep.subr.mxu0 0.0
  %1086 = vmatpush1.msra.mxu0 %v1047
  %1087 = vmatprep.subr.mxu0 0.0
  %1088 = vmatpush1.msra.mxu0 %v1048
  %1089 = vmatprep.subr.mxu0 0.0
  %1090 = vmatpush1.msra.mxu0 %v1049
  %1091 = vmatprep.subr.mxu0 0.0
  %1092 = vmatpush1.msra.mxu0 %v1050
  %1093 = vmatprep.subr.mxu0 0.0
  %1094 = vmatpush1.msra.mxu0 %v1051
  %1095 = vmatprep.subr.mxu0 0.0
  %1096 = vmatpush1.msra.mxu0 %v1052
  %1097 = vmatprep.subr.mxu0 0.0
  %1098 = vmatpush1.msra.mxu0 %v1053
  %1099 = vmatprep.subr.mxu0 0.0
  %1100 = vmatpush1.msra.mxu0 %v1054
  %1101 = vmatprep.subr.mxu0 0.0
  %1102 = vmatpush1.msra.mxu0 %v1055
  %1103 = vmatprep.subr.mxu0 0.0
  %1104 = vmatpush1.msra.mxu0 %v1056
  %1105 = vmatprep.subr.mxu0 0.0
  %1106 = vmatpush1.msra.mxu0 %v1057
  %1107 = vmatprep.subr.mxu0 0.0
  %1108 = vmatpush1.msra.mxu0 %v1058
  %1109 = vmatprep.subr.mxu0 0.0
  %1110 = vmatpush1.msra.mxu0 %v1059
  %1111 = vmatprep.subr.mxu0 0.0
  %1112 = vmatpush1.msra.mxu0 %v1060
  %1113 = vmatprep.subr.mxu0 0.0
  %1114 = vmatpush1.msra.mxu0 %v1061
  %1115 = vmatprep.subr.mxu0 0.0
  %1116 = vmatpush1.msra.mxu0 %v1062
  %1117 = vmatprep.subr.mxu0 0.0
  %1118 = vmatpush1.msra.mxu0 %v1063
  %1119 = vmatprep.subr.mxu0 0.0
  %1120 = vmatpush1.msra.mxu0 %v1064
  %1121 = vmatprep.subr.mxu0 0.0
  %1122 = vmatpush1.msra.mxu0 %v1065
  %1123 = vmatprep.subr.mxu0 0.0
  %1124 = vmatpush1.msra.mxu0 %v1066
  %1125 = vmatprep.subr.mxu0 0.0
  %1126 = vmatpush1.msra.mxu0 %v1067
  %1127 = vmatprep.subr.mxu0 0.0
  %1128 = vmatpush1.msra.mxu0 %v1068
  %1129 = vmatprep.subr.mxu0 0.0
  %1130 = vmatpush1.msra.mxu0 %v1069
  %1131 = vmatprep.subr.mxu0 0.0
  %1132 = vmatpush1.msra.mxu0 %v1070
  %1133 = vmatprep.subr.mxu0 0.0
  %1134 = vmatpush1.msra.mxu0 %v1071
  %1135 = vmatprep.subr.mxu0 0.0
  %1136 = vmatpush1.msra.mxu0 %v1072
  %1137 = vmatprep.subr.mxu0 0.0
  %1138 = vmatpush1.msra.mxu0 %v1073
  %1139 = vmatprep.subr.mxu0 0.0
  %1140 = vmatpush1.msra.mxu0 %v1074
  %1141 = vmatprep.mubr.f32.mxu0 %v1076
  %1142 = vmatmul.mubr.f32.gmra.mrb[0].mxu0 %v1075
  %v1143 = vpop.f32.mrb[0].mxu0
  %v1144 = vadd.f32 0.0, %v1143
  %v1145 = vpop.f32.mrb[0].mxu0
  %1146 = vdwg.mxu0
  %vm1147 = vcmask 15360
  %1148 = vst.msk [vmem:[%s6] sm:$0xff] %vm1147, %v1144
  // Predicated region
  $region22: #{tpu_custom_call.1} parent=0 // pred_check
    _
  $region23: #{tpu_custom_call.1} parent=0 // pred_check_branch
    %1150 = sbr.rel (0) target = $region25
  $region24: #{tpu_custom_call.1} parent=0 // pred_region
    _
  $region25: #{tpu_custom_call.1} parent=0 // pred_fallthru
    _
  // Predicated region
  $region26: #{tpu_custom_call.1} parent=0 // pred_check
    _
  $region27: #{tpu_custom_call.1} parent=0 // pred_check_branch
    %1152 = sbr.rel (0) target = $region29
  $region28: #{tpu_custom_call.1} parent=0 // pred_region
    _
  $region29: #{tpu_custom_call.1} parent=0 // pred_fallthru
    _
  // Predicated region
  $region30: #{tpu_custom_call.1} parent=0 // pred_check
    _
  $region31: #{tpu_custom_call.1} parent=0 // pred_check_branch
    %1154 = sbr.rel (0) target = $region33
  $region32: #{tpu_custom_call.1} parent=0 // pred_region
    _
  $region33: #{tpu_custom_call.1} parent=0 // pred_fallthru
    _
  // Predicated region
  $region34: #{tpu_custom_call.1} parent=0 // pred_check
    _
  $region35: #{tpu_custom_call.1} parent=0 // pred_check_branch
    %1156 = sbr.rel (0) target = $region37
  $region36: #{tpu_custom_call.1} parent=0 // pred_region
    _
  $region37: #{tpu_custom_call.1} parent=0 // pred_fallthru
    _

</llo_original>
